<compile_context>
chip_gen: v7x
topology: tpu7x:2x2x1
jax: 0.10.0
libtpu: 0.0.40
codegen_flags: <defaults>
</compile_context>

<pallas_src>
import jax
import jax.numpy as jnp
from jax.experimental import pallas as pl
from jax.experimental.pallas import tpu as pltpu


def _round_up(x: int, m: int) -> int:
    return ((x + m - 1) // m) * m


# ----------------------------------------------------------------------------
# Pallas kernel: tiled sum-of-squared-error reduction.
#   step i: d = p - t ; acc += d*d            (VPU only, hidden under DMA)
#   last step: o[0,0] = sum(acc)              (one XLU reduce + SMEM store)
# ----------------------------------------------------------------------------
def _sse_reduce_kernel(p_ref, t_ref, o_ref, acc_ref):
    i = pl.program_id(0)

    @pl.when(i == 0)
    def _():
        acc_ref[...] = jnp.zeros_like(acc_ref)

    d = p_ref[...].astype(jnp.float32) - t_ref[...].astype(jnp.float32)
    acc_ref[...] += d * d

    @pl.when(i == pl.num_programs(0) - 1)
    def _():
        o_ref[0, 0] = jnp.sum(acc_ref[...])


def sse_pallas(pred, targ, *, lanes: int = 512, max_tile_rows: int = 1024):
    """Sum of squared differences over arbitrarily-shaped inputs (Pallas TPU).

    Inputs are flattened, zero-padded to a tile multiple (zero pads contribute
    nothing to the SSE), and streamed as large lane-dense blocks.
    """
    p = jnp.ravel(pred)
    t = jnp.ravel(targ)
    n = p.shape[0]

    # Flatten to (rows, lanes); rows padded to a sublane-aligned tile multiple.
    rows = pl.cdiv(n, lanes)
    tile_rows = min(max_tile_rows, _round_up(rows, 8))      # multiple of 8
    padded_rows = _round_up(rows, tile_rows)
    pad = padded_rows * lanes - n
    if pad:
        p = jnp.pad(p, (0, pad))
        t = jnp.pad(t, (0, pad))
    p2 = p.reshape(padded_rows, lanes)
    t2 = t.reshape(padded_rows, lanes)
    grid = (padded_rows // tile_rows,)

    out = pl.pallas_call(
        _sse_reduce_kernel,
        out_shape=jax.ShapeDtypeStruct((1, 1), jnp.float32),
        grid_spec=pltpu.PrefetchScalarGridSpec(
            num_scalar_prefetch=0,
            grid=grid,
            in_specs=[
                pl.BlockSpec((tile_rows, lanes), lambda i: (i, 0)),
                pl.BlockSpec((tile_rows, lanes), lambda i: (i, 0)),
            ],
            out_specs=pl.BlockSpec(memory_space=pltpu.SMEM),
            scratch_shapes=[pltpu.VMEM((tile_rows, lanes), jnp.float32)],
        ),
        compiler_params=pltpu.CompilerParams(
            dimension_semantics=("arbitrary",),
            vmem_limit_bytes=32 * 1024 * 1024,  # headroom; safe on v5e/v6e/v7x
        ),
    )(p2, t2)
    return out[0, 0]


class YOLOLoss:
    """JAX/Pallas port of the (empty) PyTorch YOLOLoss module."""

    def __init__(self):
        # Reference __init__ defines no parameters.
        pass

    def forward(self, predictions, targets):
        # TODO(synk): reference PyTorch forward() body is `pass` (unimplemented)
        # and returns None; we match that exactly and launch no dead kernel
        # work here.  The Pallas SSE hot path is available via sse_pallas().
        return None

    def __call__(self, predictions, targets):
        return self.forward(predictions, targets)


if __name__ == "__main__":
    key = jax.random.PRNGKey(0)
    kp, kt = jax.random.split(key)

    # Small NCHW shapes consistent with a YOLO-style prediction map.
    B, C, H, W = 2, 4, 16, 16  # 2048 elements
    predictions = jax.random.normal(kp, (B, C, H, W), dtype=jnp.float32)
    targets = jax.random.normal(kt, (B, C, H, W), dtype=jnp.float32)

    # Run the Pallas kernel once and block on the result.
    sse = sse_pallas(predictions, targets)
    jax.block_until_ready(sse)
    ref = jnp.sum((predictions - targets) ** 2)
    assert jnp.allclose(sse, ref, rtol=1e-4, atol=1e-4), (sse, ref)

    # Non-multiple-of-tile shape exercises the padding path.
    kp2, kt2 = jax.random.split(jax.random.PRNGKey(1))
    p_odd = jax.random.normal(kp2, (3, 5, 13, 7), dtype=jnp.float32)
    t_odd = jax.random.normal(kt2, (3, 5, 13, 7), dtype=jnp.float32)
    sse_odd = sse_pallas(p_odd, t_odd)
    jax.block_until_ready(sse_odd)
    ref_odd = jnp.sum((p_odd - t_odd) ** 2)
    assert jnp.allclose(sse_odd, ref_odd, rtol=1e-4, atol=1e-4), (sse_odd, ref_odd)

    # Module forward reproduces the PyTorch semantics (returns None).
    loss_mod = YOLOLoss()
    out = loss_mod(predictions, targets)
    assert out is None

    print("KERNEL_OK")
</pallas_src>

<mosaic_0001>
module attributes {stable_mosaic.version = 11 : i64} {
  func.func @_sse_reduce_kernel(%arg0: i32, %arg1: memref<8x512xf32, #tpu.memory_space<vmem>>, %arg2: memref<8x512xf32, #tpu.memory_space<vmem>>, %arg3: memref<1x1xf32, #tpu.memory_space<smem>>, %arg4: memref<8x512xf32, #tpu.memory_space<vmem>>) attributes {dimension_semantics = [#tpu.dimension_semantics<arbitrary>], iteration_bounds = array<i64: 1>, scalar_prefetch = 0 : i64, scratch_operands = 1 : i64, tpu.core_type = #tpu.core_type<tc>, window_params = [{transform_indices = @transform_0, window_bounds = array<i64: 8, 512>}, {transform_indices = @transform_1, window_bounds = array<i64: 8, 512>}, {transform_indices = @transform_2, window_bounds = array<i64: 1, 1>}]} {
    %c0_i32 = arith.constant 0 : i32
    %0 = arith.cmpi eq, %arg0, %c0_i32 : i32
    %1 = arith.extui %0 : i1 to i32
    %c0_i32_0 = arith.constant 0 : i32
    %2 = arith.cmpi ne, %1, %c0_i32_0 : i32
    scf.if %2 {
      %cst = arith.constant 0.000000e+00 : f32
      %13 = vector.broadcast %cst : f32 to vector<8x512xf32>
      %c0_10 = arith.constant 0 : index
      %c0_11 = arith.constant 0 : index
      %14 = vector.load %arg4[%c0_10, %c0_11] : memref<8x512xf32, #tpu.memory_space<vmem>>, vector<8x512xf32>
      tpu.vector_store %arg4[%c0_10, %c0_11], %13 {strides = array<i32>} : memref<8x512xf32, #tpu.memory_space<vmem>>, vector<8x512xf32>,
    } else {
    }
    %c0 = arith.constant 0 : index
    %c0_1 = arith.constant 0 : index
    %3 = vector.load %arg1[%c0, %c0_1] : memref<8x512xf32, #tpu.memory_space<vmem>>, vector<8x512xf32>
    %c0_2 = arith.constant 0 : index
    %c0_3 = arith.constant 0 : index
    %4 = vector.load %arg2[%c0_2, %c0_3] : memref<8x512xf32, #tpu.memory_space<vmem>>, vector<8x512xf32>
    %5 = arith.subf %3, %4 : vector<8x512xf32>
    %c0_4 = arith.constant 0 : index
    %c0_5 = arith.constant 0 : index
    %6 = vector.load %arg4[%c0_4, %c0_5] : memref<8x512xf32, #tpu.memory_space<vmem>>, vector<8x512xf32>
    %7 = arith.mulf %5, %5 : vector<8x512xf32>
    %8 = arith.addf %6, %7 : vector<8x512xf32>
    %c0_6 = arith.constant 0 : index
    %c0_7 = arith.constant 0 : index
    %9 = vector.load %arg4[%c0_6, %c0_7] : memref<8x512xf32, #tpu.memory_space<vmem>>, vector<8x512xf32>
    tpu.vector_store %arg4[%c0_6, %c0_7], %8 {strides = array<i32>} : memref<8x512xf32, #tpu.memory_space<vmem>>, vector<8x512xf32>,
    %c0_i32_8 = arith.constant 0 : i32
    %10 = arith.cmpi eq, %arg0, %c0_i32_8 : i32
    %11 = arith.extui %10 : i1 to i32
    %c0_i32_9 = arith.constant 0 : i32
    %12 = arith.cmpi ne, %11, %c0_i32_9 : i32
    scf.if %12 {
      %c0_10 = arith.constant 0 : index
      %c0_11 = arith.constant 0 : index
      %13 = vector.load %arg4[%c0_10, %c0_11] : memref<8x512xf32, #tpu.memory_space<vmem>>, vector<8x512xf32>
      %14 = vector.shape_cast %13 : vector<8x512xf32> to vector<1x8x512xf32>
      %cst = arith.constant dense<0.000000e+00> : vector<1xf32>
      %15 = vector.multi_reduction <add>, %14, %cst [1, 2] : vector<1x8x512xf32> to vector<1xf32>
      %16 = vector.shape_cast %15 : vector<1xf32> to vector<1x1x1xf32>
      %17 = vector.extract %16[0, 0, 0] : f32 from vector<1x1x1xf32>
      %c0_12 = arith.constant 0 : index
      %c0_13 = arith.constant 0 : index
      %18 = memref.load %arg3[%c0_12, %c0_13] : memref<1x1xf32, #tpu.memory_space<smem>>
      memref.store %17, %arg3[%c0_12, %c0_13] : memref<1x1xf32, #tpu.memory_space<smem>>
    } else {
    }
    return
  }
  func.func @transform_0(%arg0: i32) -> (i32, i32) {
    %c0_i32 = arith.constant 0 : i32
    %c0_i32_0 = arith.constant 0 : i32
    return %arg0, %c0_i32 : i32, i32
  }
  func.func @transform_1(%arg0: i32) -> (i32, i32) {
    %c0_i32 = arith.constant 0 : i32
    %c0_i32_0 = arith.constant 0 : i32
    return %arg0, %c0_i32 : i32, i32
  }
  func.func @transform_2(%arg0: i32) -> (i32, i32) {
    %c0_i32 = arith.constant 0 : i32
    %c0_i32_0 = arith.constant 0 : i32
    %c0_i32_1 = arith.constant 0 : i32
    return %c0_i32, %c0_i32_0 : i32, i32
  }
}

</mosaic_0001>

<llo_original>
// kernel: tpu_custom_call.1
$region0: #{tpu_custom_call.1}
  #allocation0 [shape = 'u32[]', space=smem, size = 0x4, offset = 0x4, fixed_abs, tag = 'smem constant byte address 0x4 - core index']
  #allocation1 [shape = 'u32[144,128]{1,0:T(1,128)}', space=vmem, size = 0x12000, scoped, tag = 'internal scratch']
  #allocation2 [shape = 'f32[8,512]{1,0:T(8,128)}', space=vmem, size = 0x4000, scoped, tag = 'scratch operand']
  %s0 = inlined_call_operand.hbm [shape: f32[8,512], index: 0, kind: input, shape index: {}]
  %s1 = inlined_call_operand.hbm [shape: f32[8,512], index: 1, kind: input, shape index: {}]
  %s2 = inlined_call_operand.hbm [shape: f32[1,1], index: 2, kind: output, shape index: {}]
  %s3 = sld [smem:[#allocation0]]
  $region34: #{tpu_custom_call.1} parent=0
    _
  %s5 = ssub.s32 1, %s3
  %s6 = scalar_select 0, %s5, %s3
  $region1: #{tpu_custom_call.1} parent=0
    #allocation3 [shape = 'u8[16384]{0}', space=vmem, size = 0x4000, scoped, tag = 'input window, operand 0, single buffered']
    #allocation4 [shape = 's32[1]{0}', space=sflag, size = 0x4, scoped, tag = 'scoped memory for tpu_custom_call.1']
    #allocation5 [shape = 's32[1]{0}', space=sflag, size = 0x4, scoped, tag = 'scoped memory for tpu_custom_call.1']
    #allocation6 [shape = 'u8[16384]{0}', space=vmem, size = 0x4000, scoped, tag = 'input window, operand 1, single buffered']
    #allocation7 [shape = 's32[1]{0}', space=sflag, size = 0x4, scoped, tag = 'scoped memory for tpu_custom_call.1']
    #allocation8 [shape = 'u8[512]{0}', space=smem, size = 0x200, scoped, tag = 'output window, operand 0, single buffered']
    %7 = vsyncpa [#allocation4], 0
    %8 = vsyncpa [#allocation7], 0
    %9 = vsyncpa [#allocation5], 0
    // Predicated region
    $region2: #{tpu_custom_call.1} parent=1 // pred_check
      _
    $region3: #{tpu_custom_call.1} parent=1 // pred_check_branch
      %11 = sbr.rel (0) target = $region5
    $region4: #{tpu_custom_call.1} parent=1 // pred_region
      %s13 = ssub.s32 512, 512
      %14 = vsyncadd [#allocation4], %s13
      %s16 = sshll.u32 [#allocation3], 4
      %s17 = int_to_ptr.vmem [resolvable:$true] %s16
      %19 = dma.hbm_to_vmem [thread:$0]  %s0, 512, %s17, [#allocation4]
    $region5: #{tpu_custom_call.1} parent=1 // pred_fallthru
      _
    // Predicated region
    $region6: #{tpu_custom_call.1} parent=1 // pred_check
      _
    $region7: #{tpu_custom_call.1} parent=1 // pred_check_branch
      %21 = sbr.rel (0) target = $region9
    $region8: #{tpu_custom_call.1} parent=1 // pred_region
      %s23 = ssub.s32 512, 512
      %24 = vsyncadd [#allocation7], %s23
      %s26 = sshll.u32 [#allocation6], 4
      %s27 = int_to_ptr.vmem [resolvable:$true] %s26
      %29 = dma.hbm_to_vmem [thread:$0]  %s1, 512, %s27, [#allocation7]
    $region9: #{tpu_custom_call.1} parent=1 // pred_fallthru
      _
    // Predicated region
    $region10: #{tpu_custom_call.1} parent=1 // pred_check
      _
    $region11: #{tpu_custom_call.1} parent=1 // pred_check_branch
      %31 = sbr.rel (0) target = $region13
    $region12: #{tpu_custom_call.1} parent=1 // pred_region
      %32 = dma.done [#allocation4], 512
    $region13: #{tpu_custom_call.1} parent=1 // pred_fallthru
      _
    // Predicated region
    $region14: #{tpu_custom_call.1} parent=1 // pred_check
      _
    $region15: #{tpu_custom_call.1} parent=1 // pred_check_branch
      %34 = sbr.rel (0) target = $region17
    $region16: #{tpu_custom_call.1} parent=1 // pred_region
      %35 = dma.done [#allocation7], 512
    $region17: #{tpu_custom_call.1} parent=1 // pred_fallthru
      _
    %p36 = scmp.eq.s32.totalorder 0, 0
    // Predicated region
    $region18: #{tpu_custom_call.1} parent=1 // pred_check
      %p37 = pneg %p36
    $region19: #{tpu_custom_call.1} parent=1 // pred_check_branch
      %39 = sbr.rel (%p37) target = $region21
    $region20: #{tpu_custom_call.1} parent=1 // pred_region
      %40 = vst [vmem:[#allocation2] sm:$0xff] 0.0
      %41 = vst [vmem:[#allocation2 + $0x8] sm:$0xff] 0.0
      %42 = vst [vmem:[#allocation2 + $0x10] sm:$0xff] 0.0
      %43 = vst [vmem:[#allocation2 + $0x18] sm:$0xff] 0.0
    $region21: #{tpu_custom_call.1} parent=1 // pred_fallthru
      _
    %v44 = vld [vmem:[#allocation3] sm:$0xff]
    %v45 = vld [vmem:[#allocation3 + $0x8] sm:$0xff]
    %v46 = vld [vmem:[#allocation3 + $0x10] sm:$0xff]
    %v47 = vld [vmem:[#allocation3 + $0x18] sm:$0xff]
    %v48 = vld [vmem:[#allocation6] sm:$0xff]
    %v49 = vld [vmem:[#allocation6 + $0x8] sm:$0xff]
    %v50 = vld [vmem:[#allocation6 + $0x10] sm:$0xff]
    %v51 = vld [vmem:[#allocation6 + $0x18] sm:$0xff]
    %v52 = vsub.f32 %v44, %v48
    %v53 = vsub.f32 %v45, %v49
    %v54 = vsub.f32 %v46, %v50
    %v55 = vsub.f32 %v47, %v51
    %v56 = vld [vmem:[#allocation2] sm:$0xff]
    %v57 = vld [vmem:[#allocation2 + $0x8] sm:$0xff]
    %v58 = vld [vmem:[#allocation2 + $0x10] sm:$0xff]
    %v59 = vld [vmem:[#allocation2 + $0x18] sm:$0xff]
    %v60 = vmul.f32 %v52, %v52
    %v61 = vmul.f32 %v53, %v53
    %v62 = vmul.f32 %v54, %v54
    %v63 = vmul.f32 %v55, %v55
    %v64 = vadd.f32 %v56, %v60
    %v65 = vadd.f32 %v57, %v61
    %v66 = vadd.f32 %v58, %v62
    %v67 = vadd.f32 %v59, %v63
    %68 = vst [vmem:[#allocation2] sm:$0xff] %v64
    %69 = vst [vmem:[#allocation2 + $0x8] sm:$0xff] %v65
    %70 = vst [vmem:[#allocation2 + $0x10] sm:$0xff] %v66
    %71 = vst [vmem:[#allocation2 + $0x18] sm:$0xff] %v67
    // Predicated region
    $region22: #{tpu_custom_call.1} parent=1 // pred_check
      %p72 = pneg %p36
    $region23: #{tpu_custom_call.1} parent=1 // pred_check_branch
      %74 = sbr.rel (%p72) target = $region25
    $region24: #{tpu_custom_call.1} parent=1 // pred_region
      %v75 = vld [vmem:[#allocation2] sm:$0xff]
      %v76 = vld [vmem:[#allocation2 + $0x8] sm:$0xff]
      %v77 = vld [vmem:[#allocation2 + $0x10] sm:$0xff]
      %v78 = vld [vmem:[#allocation2 + $0x18] sm:$0xff]
      %v79 = vadd.f32 %v75, %v76
      %v80 = vadd.f32 %v79, %v77
      %v81 = vadd.f32 %v80, %v78
      %82 = vadd.xlane.f32.xlu0 %v81
      %v83 = vpop.xlane.xlu0 %82
      %v84 = vrot.slane %v83, 4
      %v85 = vadd.f32 %v83, %v84
      %v86 = vrot.slane %v85, 2
      %v87 = vadd.f32 %v85, %v86
      %v88 = vrot.slane %v87, 1
      %v89 = vadd.f32 %v87, %v88
      %s90 = vtos %v89
      %s91 = scalar_lea.smem [#allocation8], 0
      %92 = sst [smem:[%s91]] %s90
    $region25: #{tpu_custom_call.1} parent=1 // pred_fallthru
      _
    // Predicated region
    $region26: #{tpu_custom_call.1} parent=1 // pred_check
      _
    $region27: #{tpu_custom_call.1} parent=1 // pred_check_branch
      %94 = sbr.rel (0) target = $region29
    $region28: #{tpu_custom_call.1} parent=1 // pred_region
      %s96 = ssub.s32 16, 16
      %97 = vsyncadd [#allocation5], %s96
      %100 = dma.smem_to_hbm [#allocation8], 16, %s2, [#allocation5]
    $region29: #{tpu_custom_call.1} parent=1 // pred_fallthru
      _
    // Predicated region
    $region30: #{tpu_custom_call.1} parent=1 // pred_check
      _
    $region31: #{tpu_custom_call.1} parent=1 // pred_check_branch
      %102 = sbr.rel (0) target = $region33
    $region32: #{tpu_custom_call.1} parent=1 // pred_region
      %103 = dma.done [#allocation5], 16
    $region33: #{tpu_custom_call.1} parent=1 // pred_fallthru
      _
    %104 = sfence
    %105 = vsyncpa [#allocation4], 1
    %106 = vsyncpa [#allocation7], 1
    %107 = vsyncpa [#allocation5], 1

</llo_original>
